<compile_context>
chip_gen: v6e
topology: v6e:2x2x1
jax: 0.10.0
libtpu: 0.0.40
codegen_flags: <defaults>
</compile_context>

<pallas_src>
import functools
import math

import jax
import jax.numpy as jnp
from jax import lax
from jax.experimental import pallas as pl
from jax.experimental.pallas import tpu as pltpu


# ----------------------------- small helpers --------------------------------


def _round_up(x, mult):
    return ((x + mult - 1) // mult) * mult


def _pad2(a, rows, cols):
    return jnp.pad(a, ((0, rows - a.shape[0]), (0, cols - a.shape[1])))


def _vmem_capacity_bytes():
    """Per-core VMEM capacity; conservative v7x fallback if query fails."""
    try:
        return int(pltpu.get_tpu_info().vmem_capacity_bytes)
    except Exception:  # pragma: no cover - defensive
        return 64 * 1024 * 1024


def _attn_vmem_estimate(bq_tile, m_p, dq_p, h_p, o_p, in_isz, out_isz, use_mask):
    """Conservative VMEM bytes for one attention grid step (2x for pipelining)."""
    resident = (m_p * (h_p + o_p) + dq_p * h_p) * in_isz + h_p * 4
    if use_mask:
        resident += m_p * 4
    streamed = bq_tile * (dq_p * in_isz + o_p * out_isz)
    interm = bq_tile * (h_p + 2 * m_p + o_p) * 4        # f32 q-proj, s/e, acc
    return 2 * (resident + streamed) + interm


def _choose_q_tile(n8, m_p, dq_p, h_p, o_p, in_isz, out_isz, use_mask,
                   budget, block_q):
    cand = min(_round_up(block_q, 8), n8)
    if n8 >= 256:
        # Keep at least 2 query tiles so v7x's two TensorCores both get work
        # from the "parallel" grid axis.
        cand = min(cand, _round_up((n8 + 1) // 2, 8))
    cand = max(cand, 8)
    while cand > 8 and _attn_vmem_estimate(
            cand, m_p, dq_p, h_p, o_p, in_isz, out_isz, use_mask) > budget:
        cand = max(8, _round_up(cand // 2, 8))
    return cand


def _vmem_limit(est_bytes, cap_bytes):
    return int(min(int(cap_bytes * 0.75), max(32 << 20, est_bytes + (16 << 20))))


# ----------------------------- kernels ---------------------------------------


def _kv_project_kernel(k_ref, v_ref, wk_ref, bk_ref, wv_ref, bv_ref,
                       ko_ref, vo_ref):
    """linear_key = K @ Wk + bk ; linear_value = V @ Wv + bv (one row tile)."""
    k = jnp.dot(k_ref[...], wk_ref[...],
                preferred_element_type=jnp.float32) + bk_ref[...]
    v = jnp.dot(v_ref[...], wv_ref[...],
                preferred_element_type=jnp.float32) + bv_ref[...]
    ko_ref[...] = k.astype(ko_ref.dtype)
    vo_ref[...] = v.astype(vo_ref.dtype)


def _attention_kernel(q_ref, wq_ref, bq_ref, k_ref, v_ref, *rest, hidden_dim):
    """One query tile: project Q, scores vs. resident K, softmax, @ resident V."""
    if len(rest) == 2:
        mask_ref, o_ref = rest
    else:
        (o_ref,) = rest
        mask_ref = None

    # Q projection (MXU, f32 accumulation); cast to the MXU dtype of K.
    q = jnp.dot(q_ref[...], wq_ref[...],
                preferred_element_type=jnp.float32) + bq_ref[...]
    q = q.astype(k_ref.dtype)

    # scores = Q @ K^T without materializing K^T: contract dim 1 of both.
    s = lax.dot_general(q, k_ref[...], (((1,), (1,)), ((), ())),
                        preferred_element_type=jnp.float32)

    # Additive mask (0 / -1e30) over padded KV columns, resident (1, m_p).
    if mask_ref is not None:
        s = s + mask_ref[...]

    # Softmax numerator / denominator in f32.
    s_max = jnp.max(s, axis=-1, keepdims=True)
    e = jnp.exp(s - s_max)
    denom = jnp.sum(e, axis=-1, keepdims=True)

    # PV matmul on the unnormalized probabilities (clean [0,1] bf16 cast), then
    # fold 1/denom and the module's post-softmax 1/sqrt(hidden_dim) into one
    # per-row scalar applied to the small (bq, o_p) f32 accumulator.
    p = e.astype(v_ref.dtype)
    acc = jnp.dot(p, v_ref[...], preferred_element_type=jnp.float32)
    inv = pl.reciprocal(denom, approx=True) * (1.0 / math.sqrt(hidden_dim))
    o_ref[...] = (acc * inv).astype(o_ref.dtype)


# ----------------------------- wrapper ----------------------------------------


def prepare_qkv_params(params, *, mxu_dtype=jnp.float32):
    """One-time weight preprocessing: transpose to (in, out), pad lane-dense,
    cast MXU operands.  Call once per model; biases stay f32.

    params follow nn.Linear layout:
        wq: (hidden_dim, query_dim),  bq: (hidden_dim,)
        wk: (hidden_dim, key_dim),    bk: (hidden_dim,)
        wv: (output_dim, value_dim),  bv: (output_dim,)
    mxu_dtype=jnp.bfloat16 is recommended on all generations (v5e/v6e/v7x MXUs
    are bf16 native and it halves HBM/DMA bytes); softmax math stays f32.
    """
    f32 = jnp.float32
    h, dq = params["wq"].shape
    _, dk = params["wk"].shape
    o, dv = params["wv"].shape
    dq_p, dk_p, dv_p = (_round_up(d, 128) for d in (dq, dk, dv))
    h_p, o_p = _round_up(h, 128), _round_up(o, 128)
    mxu_dtype = jnp.dtype(mxu_dtype)
    return {
        "_prepared": True,
        "mxu_dtype": mxu_dtype,
        "dims": dict(dq=dq, dk=dk, dv=dv, h=h, o=o,
                     dq_p=dq_p, dk_p=dk_p, dv_p=dv_p, h_p=h_p, o_p=o_p),
        "wq": _pad2(jnp.asarray(params["wq"]).T.astype(f32), dq_p, h_p).astype(mxu_dtype),
        "wk": _pad2(jnp.asarray(params["wk"]).T.astype(f32), dk_p, h_p).astype(mxu_dtype),
        "wv": _pad2(jnp.asarray(params["wv"]).T.astype(f32), dv_p, o_p).astype(mxu_dtype),
        "bq": _pad2(jnp.asarray(params["bq"]).reshape(1, -1).astype(f32), 1, h_p),
        "bk": _pad2(jnp.asarray(params["bk"]).reshape(1, -1).astype(f32), 1, h_p),
        "bv": _pad2(jnp.asarray(params["bv"]).reshape(1, -1).astype(f32), 1, o_p),
    }


def qkv_attention(input_query, input_key, input_value, params, hidden_dim,
                  *, mxu_dtype=jnp.float32, block_q=512, kv_projection="auto"):
    """Pallas-backed forward of QKVAttention.

    params: either raw nn.Linear-shaped weights (prepared internally) or the
        result of prepare_qkv_params() (preferred: prepare once per model).
    kv_projection: "auto" | "xla" | "pallas".  "auto" uses plain XLA matmuls
        for the K/V projection when m is small (the AGIF regime) and a Pallas
        projection kernel with 512-row tiles when m is large.
    """
    if not (isinstance(params, dict) and params.get("_prepared", False)):
        params = prepare_qkv_params(params, mxu_dtype=mxu_dtype)
    mxu_dtype = params["mxu_dtype"]
    d = params["dims"]
    dq, dk, dv, h, o = d["dq"], d["dk"], d["dv"], d["h"], d["o"]
    dq_p, dk_p, dv_p, h_p, o_p = d["dq_p"], d["dk_p"], d["dv_p"], d["h_p"], d["o_p"]

    n, in_dq = input_query.shape
    m, in_dk = input_key.shape
    m2, in_dv = input_value.shape
    assert m == m2, "key/value must share their first dimension"
    assert (in_dq, in_dk, in_dv) == (dq, dk, dv), "input dims must match weights"

    out_dtype = input_query.dtype
    f32 = jnp.float32
    in_isz = jnp.dtype(mxu_dtype).itemsize
    out_isz = jnp.dtype(out_dtype).itemsize

    cap = _vmem_capacity_bytes()
    tile_budget = min(int(cap * 0.55), 44 << 20)

    # ---- lane-dense padding --------------------------------------------------
    m_p = _round_up(m, 128)
    use_mask = m < m_p
    n8 = _round_up(n, 8)
    bq_tile = _choose_q_tile(n8, m_p, dq_p, h_p, o_p, in_isz, out_isz,
                             use_mask, tile_budget, block_q)
    n_p = _round_up(n8, bq_tile)

    q_in = _pad2(input_query, n_p, dq_p).astype(mxu_dtype)
    k_in = _pad2(input_key, m_p, dk_p).astype(mxu_dtype)
    v_in = _pad2(input_value, m_p, dv_p).astype(mxu_dtype)

    # ---- K / V projections (once) --------------------------------------------
    if kv_projection == "auto":
        kv_projection = "pallas" if m_p >= 2048 else "xla"

    if kv_projection == "xla":
        # Small-m regime: the extra pallas_call + k_proj/v_proj HBM round trip
        # costs more than the projection itself; let XLA fuse the matmuls.
        k_proj = (jnp.dot(k_in, params["wk"], preferred_element_type=f32)
                  + params["bk"]).astype(mxu_dtype)
        v_proj = (jnp.dot(v_in, params["wv"], preferred_element_type=f32)
                  + params["bv"]).astype(mxu_dtype)
    else:
        bm = min(512, m_p)
        while m_p % bm:
            bm -= 128
        kv_est = (2 * ((bm * (dk_p + dv_p) + dk_p * h_p + dv_p * o_p) * in_isz
                       + (h_p + o_p) * 4
                       + bm * (h_p + o_p) * in_isz)
                  + bm * (h_p + o_p) * 4)
        kv_cost = pl.CostEstimate(
            flops=2 * (m_p * dk_p * h_p + m_p * dv_p * o_p),
            transcendentals=0,
            bytes_accessed=((m_p * (dk_p + dv_p) + dk_p * h_p + dv_p * o_p) * in_isz
                            + (h_p + o_p) * 4
                            + m_p * (h_p + o_p) * in_isz))
        k_proj, v_proj = pl.pallas_call(
            _kv_project_kernel,
            out_shape=(jax.ShapeDtypeStruct((m_p, h_p), mxu_dtype),
                       jax.ShapeDtypeStruct((m_p, o_p), mxu_dtype)),
            grid_spec=pltpu.PrefetchScalarGridSpec(
                num_scalar_prefetch=0,
                grid=(m_p // bm,),
                in_specs=[
                    pl.BlockSpec((bm, dk_p), lambda i: (i, 0)),
                    pl.BlockSpec((bm, dv_p), lambda i: (i, 0)),
                    pl.BlockSpec((dk_p, h_p), lambda i: (0, 0)),
                    pl.BlockSpec((1, h_p), lambda i: (0, 0)),
                    pl.BlockSpec((dv_p, o_p), lambda i: (0, 0)),
                    pl.BlockSpec((1, o_p), lambda i: (0, 0)),
                ],
                out_specs=(
                    pl.BlockSpec((bm, h_p), lambda i: (i, 0)),
                    pl.BlockSpec((bm, o_p), lambda i: (i, 0)),
                )),
            compiler_params=pltpu.CompilerParams(
                dimension_semantics=("parallel",),
                vmem_limit_bytes=_vmem_limit(kv_est, cap)),
            cost_estimate=kv_cost,
        )(k_in, v_in, params["wk"], params["bk"], params["wv"], params["bv"])

    # ---- gridded attention over query tiles ----------------------------------
    attn_kernel = functools.partial(_attention_kernel, hidden_dim=hidden_dim)

    in_specs = [
        pl.BlockSpec((bq_tile, dq_p), lambda i: (i, 0)),   # Q tile (streamed)
        pl.BlockSpec((dq_p, h_p), lambda i: (0, 0)),       # Wq (grid-invariant)
        pl.BlockSpec((1, h_p), lambda i: (0, 0)),          # bq
        pl.BlockSpec((m_p, h_p), lambda i: (0, 0)),        # K  (resident)
        pl.BlockSpec((m_p, o_p), lambda i: (0, 0)),        # V  (resident)
    ]
    args = [q_in, params["wq"], params["bq"], k_proj, v_proj]
    if use_mask:
        mask = jnp.where(jnp.arange(m_p) < m, 0.0, -1e30).astype(f32).reshape(1, m_p)
        in_specs.append(pl.BlockSpec((1, m_p), lambda i: (0, 0)))
        args.append(mask)

    attn_est = _attn_vmem_estimate(bq_tile, m_p, dq_p, h_p, o_p,
                                   in_isz, out_isz, use_mask)
    attn_cost = pl.CostEstimate(
        flops=2 * (n_p * dq_p * h_p + n_p * m_p * h_p + n_p * m_p * o_p),
        transcendentals=n_p * m_p + n_p,
        bytes_accessed=(sum(int(x.size) * x.dtype.itemsize for x in args)
                        + n_p * o_p * out_isz))
    out = pl.pallas_call(
        attn_kernel,
        out_shape=jax.ShapeDtypeStruct((n_p, o_p), out_dtype),
        grid_spec=pltpu.PrefetchScalarGridSpec(
            num_scalar_prefetch=0,
            grid=(n_p // bq_tile,),
            in_specs=in_specs,
            out_specs=pl.BlockSpec((bq_tile, o_p), lambda i: (i, 0))),
        compiler_params=pltpu.CompilerParams(
            dimension_semantics=("parallel",),
            vmem_limit_bytes=_vmem_limit(attn_est, cap)),
        cost_estimate=attn_cost,
    )(*args)

    return out[:n, :o]


# ----------------------------- reference & test -------------------------------


def _reference(input_query, input_key, input_value, params, hidden_dim):
    q = input_query @ params["wq"].T + params["bq"]
    k = input_key @ params["wk"].T + params["bk"]
    v = input_value @ params["wv"].T + params["bv"]
    s = jax.nn.softmax(q @ k.T, axis=-1) / math.sqrt(hidden_dim)
    return s @ v


if __name__ == "__main__":
    # Small shapes consistent with the module's (n, d_q)/(m, d_k)/(m, d_v) API.
    # n is chosen so the query grid has 2 tiles and the n/m/feature padding +
    # additive-mask paths are all exercised.
    n, m = 250, 40
    query_dim = key_dim = value_dim = 24
    hidden_dim, output_dim = 32, 48

    key = jax.random.PRNGKey(0)
    keys = jax.random.split(key, 9)

    input_query = jax.random.normal(keys[0], (n, query_dim), dtype=jnp.float32)
    input_key = jax.random.normal(keys[1], (m, key_dim), dtype=jnp.float32)
    input_value = jax.random.normal(keys[2], (m, value_dim), dtype=jnp.float32)

    # Deterministic parameter init (shapes follow nn.Linear: (out, in) weight).
    params = {
        "wq": jax.random.normal(keys[3], (hidden_dim, query_dim), jnp.float32) * 0.1,
        "bq": jax.random.normal(keys[4], (hidden_dim,), jnp.float32) * 0.1,
        "wk": jax.random.normal(keys[5], (hidden_dim, key_dim), jnp.float32) * 0.1,
        "bk": jax.random.normal(keys[6], (hidden_dim,), jnp.float32) * 0.1,
        "wv": jax.random.normal(keys[7], (output_dim, value_dim), jnp.float32) * 0.1,
        "bv": jax.random.normal(keys[8], (output_dim,), jnp.float32) * 0.1,
    }

    ref = _reference(input_query, input_key, input_value, params, hidden_dim)

    # Preprocessing hoisted out of the per-call path: prepare once per model.
    prepared_f32 = prepare_qkv_params(params)                     # f32 MXU
    prepared_bf16 = prepare_qkv_params(params, mxu_dtype=jnp.bfloat16)

    # f32 MXU path, XLA KV projection (small-m auto path).
    out = qkv_attention(input_query, input_key, input_value, prepared_f32,
                        hidden_dim)
    out = jax.block_until_ready(out)
    assert out.shape == (n, output_dim)
    assert jnp.allclose(out, ref, atol=1e-3, rtol=1e-3), float(
        jnp.max(jnp.abs(out - ref)))

    # f32 MXU path, Pallas KV-projection kernel (large-m path, forced).
    out_kv = qkv_attention(input_query, input_key, input_value, prepared_f32,
                           hidden_dim, kv_projection="pallas")
    out_kv = jax.block_until_ready(out_kv)
    assert out_kv.shape == (n, output_dim)
    assert jnp.allclose(out_kv, ref, atol=1e-3, rtol=1e-3), float(
        jnp.max(jnp.abs(out_kv - ref)))

    # bf16 MXU path (recommended on v5e/v6e/v7x; looser check).
    out_bf16 = qkv_attention(input_query, input_key, input_value, prepared_bf16,
                             hidden_dim)
    out_bf16 = jax.block_until_ready(out_bf16)
    assert out_bf16.shape == (n, output_dim)
    assert jnp.allclose(out_bf16, ref, atol=5e-2, rtol=5e-2), float(
        jnp.max(jnp.abs(out_bf16 - ref)))

    print("KERNEL_OK")
</pallas_src>

<mosaic_0001>
module attributes {stable_mosaic.version = 11 : i64} {
  func.func @_attention_kernel(%arg0: i32, %arg1: memref<128x128xf32, #tpu.memory_space<vmem>>, %arg2: memref<128x128xf32, #tpu.memory_space<vmem>>, %arg3: memref<1x128xf32, #tpu.memory_space<vmem>>, %arg4: memref<128x128xf32, #tpu.memory_space<vmem>>, %arg5: memref<128x128xf32, #tpu.memory_space<vmem>>, %arg6: memref<1x128xf32, #tpu.memory_space<vmem>>, %arg7: memref<128x128xf32, #tpu.memory_space<vmem>>) attributes {dimension_semantics = [#tpu.dimension_semantics<parallel>], iteration_bounds = array<i64: 2>, scalar_prefetch = 0 : i64, scratch_operands = 0 : i64, tpu.core_type = #tpu.core_type<tc>, window_params = [{transform_indices = @transform_0, window_bounds = array<i64: 128, 128>}, {pipeline_mode = #tpu.pipeline_mode<synchronous>, transform_indices = @transform_1, window_bounds = array<i64: 128, 128>}, {pipeline_mode = #tpu.pipeline_mode<synchronous>, transform_indices = @transform_2, window_bounds = array<i64: 1, 128>}, {pipeline_mode = #tpu.pipeline_mode<synchronous>, transform_indices = @transform_3, window_bounds = array<i64: 128, 128>}, {pipeline_mode = #tpu.pipeline_mode<synchronous>, transform_indices = @transform_4, window_bounds = array<i64: 128, 128>}, {pipeline_mode = #tpu.pipeline_mode<synchronous>, transform_indices = @transform_5, window_bounds = array<i64: 1, 128>}, {transform_indices = @transform_6, window_bounds = array<i64: 128, 128>}]} {
    %c0 = arith.constant 0 : index
    %c0_0 = arith.constant 0 : index
    %0 = vector.load %arg1[%c0, %c0_0] : memref<128x128xf32, #tpu.memory_space<vmem>>, vector<128x128xf32>
    %c0_1 = arith.constant 0 : index
    %c0_2 = arith.constant 0 : index
    %1 = vector.load %arg2[%c0_1, %c0_2] : memref<128x128xf32, #tpu.memory_space<vmem>>, vector<128x128xf32>
    %cst = arith.constant dense<0.000000e+00> : vector<128x128xf32>
    %2 = tpu.matmul %0, %1, %cst {dimension_numbers = #tpu.dot_dimension_numbers<[1], [0], [0], [1], [0, 0, 1, 1], [], []>} : vector<128x128xf32>, vector<128x128xf32>, vector<128x128xf32> -> vector<128x128xf32>
    %c0_3 = arith.constant 0 : index
    %c0_4 = arith.constant 0 : index
    %3 = vector.load %arg3[%c0_3, %c0_4] : memref<1x128xf32, #tpu.memory_space<vmem>>, vector<1x128xf32>
    %4 = vector.broadcast %3 : vector<1x128xf32> to vector<128x128xf32>
    %5 = arith.addf %2, %4 : vector<128x128xf32>
    %c0_5 = arith.constant 0 : index
    %c0_6 = arith.constant 0 : index
    %6 = vector.load %arg4[%c0_5, %c0_6] : memref<128x128xf32, #tpu.memory_space<vmem>>, vector<128x128xf32>
    %cst_7 = arith.constant dense<0.000000e+00> : vector<128x128xf32>
    %7 = tpu.matmul %5, %6, %cst_7 {dimension_numbers = #tpu.dot_dimension_numbers<[1], [1], [0], [0], [0, 0, 1, 0], [], []>} : vector<128x128xf32>, vector<128x128xf32>, vector<128x128xf32> -> vector<128x128xf32>
    %c0_8 = arith.constant 0 : index
    %c0_9 = arith.constant 0 : index
    %8 = vector.load %arg6[%c0_8, %c0_9] : memref<1x128xf32, #tpu.memory_space<vmem>>, vector<1x128xf32>
    %9 = vector.broadcast %8 : vector<1x128xf32> to vector<128x128xf32>
    %10 = arith.addf %7, %9 : vector<128x128xf32>
    %cst_10 = arith.constant dense<0xFF800000> : vector<128xf32>
    %11 = vector.multi_reduction <maximumf>, %10, %cst_10 [1] : vector<128x128xf32> to vector<128xf32>
    %12 = vector.shape_cast %11 : vector<128xf32> to vector<128x1xf32>
    %13 = vector.broadcast %12 : vector<128x1xf32> to vector<128x128xf32>
    %14 = arith.subf %10, %13 : vector<128x128xf32>
    %15 = math.exp %14 : vector<128x128xf32>
    %cst_11 = arith.constant dense<0.000000e+00> : vector<128xf32>
    %16 = vector.multi_reduction <add>, %15, %cst_11 [1] : vector<128x128xf32> to vector<128xf32>
    %17 = vector.shape_cast %16 : vector<128xf32> to vector<128x1xf32>
    %c0_12 = arith.constant 0 : index
    %c0_13 = arith.constant 0 : index
    %18 = vector.load %arg5[%c0_12, %c0_13] : memref<128x128xf32, #tpu.memory_space<vmem>>, vector<128x128xf32>
    %cst_14 = arith.constant dense<0.000000e+00> : vector<128x128xf32>
    %19 = tpu.matmul %15, %18, %cst_14 {dimension_numbers = #tpu.dot_dimension_numbers<[1], [0], [0], [1], [0, 0, 1, 1], [], []>} : vector<128x128xf32>, vector<128x128xf32>, vector<128x128xf32> -> vector<128x128xf32>
    %20 = tpu.reciprocal %17 {approx = true} : vector<128x1xf32> -> vector<128x1xf32>
    %cst_15 = arith.constant 0.176776692 : f32
    %21 = vector.broadcast %cst_15 : f32 to vector<128x1xf32>
    %22 = arith.mulf %20, %21 : vector<128x1xf32>
    %23 = vector.broadcast %22 : vector<128x1xf32> to vector<128x128xf32>
    %24 = arith.mulf %19, %23 : vector<128x128xf32>
    %c0_16 = arith.constant 0 : index
    %c0_17 = arith.constant 0 : index
    %25 = vector.load %arg7[%c0_16, %c0_17] : memref<128x128xf32, #tpu.memory_space<vmem>>, vector<128x128xf32>
    tpu.vector_store %arg7[%c0_16, %c0_17], %24 {strides = array<i32>} : memref<128x128xf32, #tpu.memory_space<vmem>>, vector<128x128xf32>,
    return
  }
  func.func @transform_0(%arg0: i32) -> (i32, i32) {
    %c0_i32 = arith.constant 0 : i32
    %c0_i32_0 = arith.constant 0 : i32
    return %arg0, %c0_i32 : i32, i32
  }
  func.func @transform_1(%arg0: i32) -> (i32, i32) {
    %c0_i32 = arith.constant 0 : i32
    %c0_i32_0 = arith.constant 0 : i32
    %c0_i32_1 = arith.constant 0 : i32
    return %c0_i32, %c0_i32_0 : i32, i32
  }
  func.func @transform_2(%arg0: i32) -> (i32, i32) {
    %c0_i32 = arith.constant 0 : i32
    %c0_i32_0 = arith.constant 0 : i32
    %c0_i32_1 = arith.constant 0 : i32
    return %c0_i32, %c0_i32_0 : i32, i32
  }
  func.func @transform_3(%arg0: i32) -> (i32, i32) {
    %c0_i32 = arith.constant 0 : i32
    %c0_i32_0 = arith.constant 0 : i32
    %c0_i32_1 = arith.constant 0 : i32
    return %c0_i32, %c0_i32_0 : i32, i32
  }
  func.func @transform_4(%arg0: i32) -> (i32, i32) {
    %c0_i32 = arith.constant 0 : i32
    %c0_i32_0 = arith.constant 0 : i32
    %c0_i32_1 = arith.constant 0 : i32
    return %c0_i32, %c0_i32_0 : i32, i32
  }
  func.func @transform_5(%arg0: i32) -> (i32, i32) {
    %c0_i32 = arith.constant 0 : i32
    %c0_i32_0 = arith.constant 0 : i32
    %c0_i32_1 = arith.constant 0 : i32
    return %c0_i32, %c0_i32_0 : i32, i32
  }
  func.func @transform_6(%arg0: i32) -> (i32, i32) {
    %c0_i32 = arith.constant 0 : i32
    %c0_i32_0 = arith.constant 0 : i32
    return %arg0, %c0_i32 : i32, i32
  }
}

</mosaic_0001>

<llo_original>
// kernel: tpu_custom_call.1
$region0: #{tpu_custom_call.1}
  #allocation0 [shape = 'u32[]', space=smem, size = 0x4, offset = 0x4, fixed_abs, tag = 'smem constant byte address 0x4 - core index']
  #allocation1 [shape = 'u32[144,128]{1,0:T(1,128)}', space=vmem, size = 0x12000, scoped, tag = 'internal scratch']
  %s0 = inlined_call_operand.hbm [shape: f32[256,128], index: 0, kind: input, shape index: {}]
  %s1 = inlined_call_operand.hbm [shape: f32[128,128], index: 1, kind: input, shape index: {}]
  %s2 = inlined_call_operand.vmem [shape: f32[1,128], index: 2, kind: input, shape index: {}]
  %s3 = inlined_call_operand.hbm [shape: f32[128,128], index: 3, kind: input, shape index: {}]
  %s4 = inlined_call_operand.hbm [shape: f32[128,128], index: 4, kind: input, shape index: {}]
  %s5 = inlined_call_operand.vmem [shape: f32[1,128], index: 5, kind: input, shape index: {}]
  %s6 = inlined_call_operand.hbm [shape: f32[256,128], index: 6, kind: output, shape index: {}]
  %s7 = sld [smem:[#allocation0]]
  $region73: #{tpu_custom_call.1} parent=0
    _
  %s9 = ssub.s32 1, %s7
  %s10 = scalar_select 0, %s9, %s7
  $region1: #{tpu_custom_call.1} parent=0
    #allocation2 [shape = 'u8[131072]{0}', space=vmem, size = 0x20000, scoped, tag = 'input window, operand 0']
    #allocation3 [shape = 's32[2]{0}', space=sflag, size = 0x8, scoped, tag = 'scoped memory for tpu_custom_call.1']
    #allocation4 [shape = 's32[2]{0}', space=sflag, size = 0x8, scoped, tag = 'scoped memory for tpu_custom_call.1']
    #allocation5 [shape = 'u8[65536]{0}', space=vmem, size = 0x10000, scoped, tag = 'input window, operand 1, single buffered']
    #allocation6 [shape = 's32[1]{0}', space=sflag, size = 0x4, scoped, tag = 'scoped memory for tpu_custom_call.1']
    #allocation7 [shape = 'u8[65536]{0}', space=vmem, size = 0x10000, scoped, tag = 'input window, operand 3, single buffered']
    #allocation8 [shape = 'u8[65536]{0}', space=vmem, size = 0x10000, scoped, tag = 'input window, operand 4, single buffered']
    #allocation9 [shape = 's32[1]{0}', space=sflag, size = 0x4, scoped, tag = 'scoped memory for tpu_custom_call.1']
    #allocation10 [shape = 'u8[131072]{0}', space=vmem, size = 0x20000, scoped, tag = 'output window, operand 0']
    %11 = vsyncpa [#allocation3], 0
    %s12 = scalar_lea.sflag [#allocation3], 1
    %13 = vsyncpa %s12, 0
    %14 = vsyncpa [#allocation6], 0
    %15 = vsyncpa [#allocation9], 0
    %16 = vsyncpa [#allocation4], 0
    %s17 = scalar_lea.sflag [#allocation4], 1
    %18 = vsyncpa %s17, 0
    loop: start=0, step=1, limit=4
    $region2: #{tpu_custom_call.1} parent=1 // loop_pre_header
      _
    $region3: #{tpu_custom_call.1} parent=1 // loop_header
      %s20 = sphi 0, %s24
      %p21 = scmp.ge.s32.totalorder %s20, 4
      %s30 = sphi 0, %s32
      %s33 = sphi 0, %s30
      %s34 = sphi 0, %s33
      %s50 = sphi 0, %s34
      %s54 = sphi 0, %s54
      %s56 = sphi 0, %s54
      %s57 = sphi 0, %s56
      %s71 = sphi 0, %s57
      %s75 = sphi 0, %s75
      %s77 = sphi 0, %s75
      %s78 = sphi 0, %s77
      %s92 = sphi 0, %s78
      %s96 = sphi 0, %s96
      %s98 = sphi 0, %s96
      %s99 = sphi 0, %s98
      %s113 = sphi 0, %s99
      %s117 = sphi 0, %s117
      %s119 = sphi 0, %s117
      %s120 = sphi 0, %s119
      %s134 = sphi 0, %s120
      %s138 = sphi 0, %s138
      %s140 = sphi 0, %s138
      %s141 = sphi 0, %s140
      %s155 = sphi 0, %s141
      %s161 = sphi 0, %s163
      %s164 = sphi 0, %s161
      %s165 = sphi 0, %s164
      %s181 = sphi 0, %s165
    $region4: #{tpu_custom_call.1} parent=1 // loop_header_branch
      %23 = sbr.rel (%p21) target = $region8
    $region5: #{tpu_custom_call.1} parent=1 // loop_body
      %s25 = ssub.s32 %s20, 1
      %s26 = ssub.s32 %s20, 2
      %s27 = sadd.s32 %s20, 1
      %s28 = ssub.s32 %s20, %s27
      %p29 = scmp.eq.s32.totalorder %s28, 0
      %s31 = sadd.s32 %s30, 1
      %s32 = scalar_select %p29, %s30, %s31
      %p35 = pneg %p29
      %p36 = scmp.eq.s32.totalorder %s20, 1
      %p37 = por %p35, %p36
      %p38 = scmp.ne.s32.totalorder %s30, %s33
      %p39 = scmp.eq.s32.totalorder %s20, 0
      %p40 = por %p38, %p39
      %p41 = scmp.ne.s32.totalorder %s30, %s33
      %p42 = scmp.eq.s32.totalorder %s25, 1
      %p43 = por %p41, %p42
      %p44 = scmp.ne.s32.totalorder %s33, %s34
      %p45 = scmp.eq.s32.totalorder %s25, 0
      %p46 = por %p44, %p45
      %p47 = scmp.ne.s32.totalorder %s33, %s34
      %p48 = scmp.eq.s32.totalorder %s26, 1
      %p49 = por %p47, %p48
      %p51 = scmp.ne.s32.totalorder %s34, %s50
      %p52 = scmp.eq.s32.totalorder %s26, 0
      %p53 = por %p51, %p52
      %s55 = sadd.s32 %s54, 1
      %p58 = scmp.eq.s32.totalorder %s20, 1
      %p59 = scmp.ne.s32.totalorder %s54, %s56
      %p60 = scmp.eq.s32.totalorder %s20, 0
      %p61 = por %p59, %p60
      %p62 = scmp.ne.s32.totalorder %s54, %s56
      %p63 = scmp.eq.s32.totalorder %s25, 1
      %p64 = por %p62, %p63
      %p65 = scmp.ne.s32.totalorder %s56, %s57
      %p66 = scmp.eq.s32.totalorder %s25, 0
      %p67 = por %p65, %p66
      %p68 = scmp.ne.s32.totalorder %s56, %s57
      %p69 = scmp.eq.s32.totalorder %s26, 1
      %p70 = por %p68, %p69
      %p72 = scmp.ne.s32.totalorder %s57, %s71
      %p73 = scmp.eq.s32.totalorder %s26, 0
      %p74 = por %p72, %p73
      %s76 = sadd.s32 %s75, 1
      %p79 = scmp.eq.s32.totalorder %s20, 1
      %p80 = scmp.ne.s32.totalorder %s75, %s77
      %p81 = scmp.eq.s32.totalorder %s20, 0
      %p82 = por %p80, %p81
      %p83 = scmp.ne.s32.totalorder %s75, %s77
      %p84 = scmp.eq.s32.totalorder %s25, 1
      %p85 = por %p83, %p84
      %p86 = scmp.ne.s32.totalorder %s77, %s78
      %p87 = scmp.eq.s32.totalorder %s25, 0
      %p88 = por %p86, %p87
      %p89 = scmp.ne.s32.totalorder %s77, %s78
      %p90 = scmp.eq.s32.totalorder %s26, 1
      %p91 = por %p89, %p90
      %p93 = scmp.ne.s32.totalorder %s78, %s92
      %p94 = scmp.eq.s32.totalorder %s26, 0
      %p95 = por %p93, %p94
      %s97 = sadd.s32 %s96, 1
      %p100 = scmp.eq.s32.totalorder %s20, 1
      %p101 = scmp.ne.s32.totalorder %s96, %s98
      %p102 = scmp.eq.s32.totalorder %s20, 0
      %p103 = por %p101, %p102
      %p104 = scmp.ne.s32.totalorder %s96, %s98
      %p105 = scmp.eq.s32.totalorder %s25, 1
      %p106 = por %p104, %p105
      %p107 = scmp.ne.s32.totalorder %s98, %s99
      %p108 = scmp.eq.s32.totalorder %s25, 0
      %p109 = por %p107, %p108
      %p110 = scmp.ne.s32.totalorder %s98, %s99
      %p111 = scmp.eq.s32.totalorder %s26, 1
      %p112 = por %p110, %p111
      %p114 = scmp.ne.s32.totalorder %s99, %s113
      %p115 = scmp.eq.s32.totalorder %s26, 0
      %p116 = por %p114, %p115
      %s118 = sadd.s32 %s117, 1
      %p121 = scmp.eq.s32.totalorder %s20, 1
      %p122 = scmp.ne.s32.totalorder %s117, %s119
      %p123 = scmp.eq.s32.totalorder %s20, 0
      %p124 = por %p122, %p123
      %p125 = scmp.ne.s32.totalorder %s117, %s119
      %p126 = scmp.eq.s32.totalorder %s25, 1
      %p127 = por %p125, %p126
      %p128 = scmp.ne.s32.totalorder %s119, %s120
      %p129 = scmp.eq.s32.totalorder %s25, 0
      %p130 = por %p128, %p129
      %p131 = scmp.ne.s32.totalorder %s119, %s120
      %p132 = scmp.eq.s32.totalorder %s26, 1
      %p133 = por %p131, %p132
      %p135 = scmp.ne.s32.totalorder %s120, %s134
      %p136 = scmp.eq.s32.totalorder %s26, 0
      %p137 = por %p135, %p136
      %s139 = sadd.s32 %s138, 1
      %p142 = scmp.eq.s32.totalorder %s20, 1
      %p143 = scmp.ne.s32.totalorder %s138, %s140
      %p144 = scmp.eq.s32.totalorder %s20, 0
      %p145 = por %p143, %p144
      %p146 = scmp.ne.s32.totalorder %s138, %s140
      %p147 = scmp.eq.s32.totalorder %s25, 1
      %p148 = por %p146, %p147
      %p149 = scmp.ne.s32.totalorder %s140, %s141
      %p150 = scmp.eq.s32.totalorder %s25, 0
      %p151 = por %p149, %p150
      %p152 = scmp.ne.s32.totalorder %s140, %s141
      %p153 = scmp.eq.s32.totalorder %s26, 1
      %p154 = por %p152, %p153
      %p156 = scmp.ne.s32.totalorder %s141, %s155
      %p157 = scmp.eq.s32.totalorder %s26, 0
      %p158 = por %p156, %p157
      %s159 = ssub.s32 %s20, %s27
      %p160 = scmp.eq.s32.totalorder %s159, 0
      %s162 = sadd.s32 %s161, 1
      %s163 = scalar_select %p160, %s161, %s162
      %p166 = pneg %p160
      %p167 = scmp.eq.s32.totalorder %s20, 1
      %p168 = por %p166, %p167
      %p169 = scmp.ne.s32.totalorder %s161, %s164
      %p170 = scmp.eq.s32.totalorder %s20, 0
      %p171 = por %p169, %p170
      %p172 = scmp.ne.s32.totalorder %s161, %s164
      %p173 = scmp.eq.s32.totalorder %s25, 1
      %p174 = por %p172, %p173
      %p175 = scmp.ne.s32.totalorder %s164, %s165
      %p176 = scmp.eq.s32.totalorder %s25, 0
      %p177 = por %p175, %p176
      %p178 = scmp.ne.s32.totalorder %s164, %s165
      %p179 = scmp.eq.s32.totalorder %s26, 1
      %p180 = por %p178, %p179
      %p182 = scmp.ne.s32.totalorder %s165, %s181
      %p183 = scmp.eq.s32.totalorder %s26, 0
      %p184 = por %p182, %p183
      %p185 = scmp.le.s32.totalorder 1, %s20
      %p186 = scmp.lt.s32.totalorder %s20, 3
      %p187 = pnand %p185, %p186
      %p188 = pneg %p187
      // Predicated region
      $region9: #{tpu_custom_call.1} parent=5 // pred_check
        _
      $region10: #{tpu_custom_call.1} parent=5 // pred_check_branch
        %190 = sbr.rel (%p187) target = $region12
      $region11: #{tpu_custom_call.1} parent=5 // pred_region
        %s191 = ssub.s32 %s20, 1
        // Predicated region
        $region13: #{tpu_custom_call.1} parent=11 // pred_check
          %p192 = pneg %p67
        $region14: #{tpu_custom_call.1} parent=11 // pred_check_branch
          %194 = sbr.rel (%p192) target = $region16
        $region15: #{tpu_custom_call.1} parent=11 // pred_region
          %s196 = ssub.s32 2048, 2048
          %197 = vsyncadd [#allocation6], %s196
          %s198 = sshll.u32 [#allocation5], 4
          %s199 = int_to_ptr.vmem [resolvable:$true] %s198
          %204 = dma.hbm_to_vmem [thread:$0]  %s1, 2048, %s199, [#allocation6], 128, 128, 8
        $region16: #{tpu_custom_call.1} parent=11 // pred_fallthru
          _
        // Predicated region
        $region17: #{tpu_custom_call.1} parent=11 // pred_check
          %p205 = pneg %p88
        $region18: #{tpu_custom_call.1} parent=11 // pred_check_branch
          %207 = sbr.rel (%p205) target = $region20
        $region19: #{tpu_custom_call.1} parent=11 // pred_region
          _
        $region20: #{tpu_custom_call.1} parent=11 // pred_fallthru
          _
        // Predicated region
        $region21: #{tpu_custom_call.1} parent=11 // pred_check
          %p208 = pneg %p109
        $region22: #{tpu_custom_call.1} parent=11 // pred_check_branch
          %210 = sbr.rel (%p208) target = $region24
        $region23: #{tpu_custom_call.1} parent=11 // pred_region
          %s212 = ssub.s32 2048, 2048
          %213 = vsyncadd [#allocation6], %s212
          %s214 = sshll.u32 [#allocation7], 4
          %s215 = int_to_ptr.vmem [resolvable:$true] %s214
          %220 = dma.hbm_to_vmem [thread:$0]  %s3, 2048, %s215, [#allocation6], 128, 128, 8
        $region24: #{tpu_custom_call.1} parent=11 // pred_fallthru
          _
        // Predicated region
        $region25: #{tpu_custom_call.1} parent=11 // pred_check
          %p221 = pneg %p130
        $region26: #{tpu_custom_call.1} parent=11 // pred_check_branch
          %223 = sbr.rel (%p221) target = $region28
        $region27: #{tpu_custom_call.1} parent=11 // pred_region
          %s225 = ssub.s32 2048, 2048
          %226 = vsyncadd [#allocation9], %s225
          %s227 = sshll.u32 [#allocation8], 4
          %s228 = int_to_ptr.vmem [resolvable:$true] %s227
          %233 = dma.hbm_to_vmem [thread:$0]  %s4, 2048, %s228, [#allocation9], 128, 128, 8
        $region28: #{tpu_custom_call.1} parent=11 // pred_fallthru
          _
        // Predicated region
        $region29: #{tpu_custom_call.1} parent=11 // pred_check
          %p234 = pneg %p151
        $region30: #{tpu_custom_call.1} parent=11 // pred_check_branch
          %236 = sbr.rel (%p234) target = $region32
        $region31: #{tpu_custom_call.1} parent=11 // pred_region
          _
        $region32: #{tpu_custom_call.1} parent=11 // pred_fallthru
          _
      $region12: #{tpu_custom_call.1} parent=5 // pred_fallthru
        _
      %p237 = scmp.lt.s32.totalorder %s20, 2
      // Predicated region
      $region33: #{tpu_custom_call.1} parent=5 // pred_check
        %p238 = pneg %p237
      $region34: #{tpu_custom_call.1} parent=5 // pred_check_branch
        %240 = sbr.rel (%p238) target = $region36
      $region35: #{tpu_custom_call.1} parent=5 // pred_region
        // Predicated region
        $region37: #{tpu_custom_call.1} parent=35 // pred_check
          %p241 = pneg %p40
        $region38: #{tpu_custom_call.1} parent=35 // pred_check_branch
          %243 = sbr.rel (%p241) target = $region40
        $region39: #{tpu_custom_call.1} parent=35 // pred_region
          %s244 = sand.u32 %s30, 1
          %s245 = scalar_lea.sflag [#allocation3], %s244
          %s246 = sand.u32 %s30, 1
          %s247 = smul.addr %s246, 128
          %s248 = scalar_lea.vmem [#allocation2], %s247
          %s249 = smul.u32 16, %s20
          %s251 = ssub.s32 2048, 2048
          %252 = vsyncadd %s245, %s251
          %s253 = smul.addr %s249, 128
          %s254 = scalar_lea.hbm %s0, %s253
          %s255 = sshll.u32 %s248, 4
          %s256 = int_to_ptr.vmem [resolvable:$true] %s255
          %261 = dma.hbm_to_vmem [thread:$0]  %s254, 2048, %s256, %s245, 128, 128, 8
        $region40: #{tpu_custom_call.1} parent=35 // pred_fallthru
          _
      $region36: #{tpu_custom_call.1} parent=5 // pred_fallthru
        _
      %p262 = scmp.le.s32.totalorder 1, %s20
      %p263 = scmp.lt.s32.totalorder %s20, 3
      %p264 = pnand %p262, %p263
      %p265 = pneg %p264
      // Predicated region
      $region41: #{tpu_custom_call.1} parent=5 // pred_check
        _
      $region42: #{tpu_custom_call.1} parent=5 // pred_check_branch
        %267 = sbr.rel (%p264) target = $region44
      $region43: #{tpu_custom_call.1} parent=5 // pred_region
        %s268 = ssub.s32 %s20, 1
        %s269 = sand.u32 %s33, 1
        %s270 = scalar_lea.sflag [#allocation3], %s269
        %s271 = sand.u32 %s33, 1
        %s272 = smul.addr %s271, 128
        %s273 = scalar_lea.vmem [#allocation2], %s272
        // Predicated region
        $region45: #{tpu_custom_call.1} parent=43 // pred_check
          %p274 = pneg %p46
        $region46: #{tpu_custom_call.1} parent=43 // pred_check_branch
          %276 = sbr.rel (%p274) target = $region48
        $region47: #{tpu_custom_call.1} parent=43 // pred_region
          %277 = dma.done %s270, 2048
        $region48: #{tpu_custom_call.1} parent=43 // pred_fallthru
          _
        // Predicated region
        $region49: #{tpu_custom_call.1} parent=43 // pred_check
          %p278 = pneg %p67
        $region50: #{tpu_custom_call.1} parent=43 // pred_check_branch
          %280 = sbr.rel (%p278) target = $region52
        $region51: #{tpu_custom_call.1} parent=43 // pred_region
          %281 = dma.done [#allocation6], 2048
        $region52: #{tpu_custom_call.1} parent=43 // pred_fallthru
          _
        // Predicated region
        $region53: #{tpu_custom_call.1} parent=43 // pred_check
          %p282 = pneg %p109
        $region54: #{tpu_custom_call.1} parent=43 // pred_check_branch
          %284 = sbr.rel (%p282) target = $region56
        $region55: #{tpu_custom_call.1} parent=43 // pred_region
          %285 = dma.done [#allocation6], 2048
        $region56: #{tpu_custom_call.1} parent=43 // pred_fallthru
          _
        // Predicated region
        $region57: #{tpu_custom_call.1} parent=43 // pred_check
          %p286 = pneg %p130
        $region58: #{tpu_custom_call.1} parent=43 // pred_check_branch
          %288 = sbr.rel (%p286) target = $region60
        $region59: #{tpu_custom_call.1} parent=43 // pred_region
          %289 = dma.done [#allocation9], 2048
        $region60: #{tpu_custom_call.1} parent=43 // pred_fallthru
          _
        %s290 = sand.u32 %s33, 1
        %s291 = scalar_lea.sflag [#allocation3], %s290
        %s292 = sand.u32 %s33, 1
        %s293 = smul.addr %s292, 128
        %s294 = scalar_lea.vmem [#allocation2], %s293
        %p295 = pneg %p46
        %p296 = pneg %p43
        %p297 = pneg %p67
        %p298 = pneg %p64
        %p299 = pneg %p88
        %p300 = pneg %p85
        %p301 = pneg %p109
        %p302 = pneg %p106
        %p303 = pneg %p130
        %p304 = pneg %p127
        %p305 = pneg %p151
        %p306 = pneg %p148
        %p307 = pneg %p177
        %p308 = pneg %p174
        %s309 = sand.u32 %s164, 1
        %s310 = scalar_lea.sflag [#allocation4], %s309
        %s311 = sand.u32 %s164, 1
        %s312 = smul.addr %s311, 128
        %s313 = scalar_lea.vmem [#allocation10], %s312
        %s314 = smul.u32 16, %s25
        %s315 = smul.u32 16, %s25
        %v316 = vld [vmem:[%s273] sm:$0xff]
        %v317 = vld [vmem:[%s273 + $0x8] sm:$0xff]
        %v318 = vld [vmem:[%s273 + $0x10] sm:$0xff]
        %v319 = vld [vmem:[%s273 + $0x18] sm:$0xff]
        %v320 = vld [vmem:[%s273 + $0x20] sm:$0xff]
        %v321 = vld [vmem:[%s273 + $0x28] sm:$0xff]
        %v322 = vld [vmem:[%s273 + $0x30] sm:$0xff]
        %v323 = vld [vmem:[%s273 + $0x38] sm:$0xff]
        %v324 = vld [vmem:[%s273 + $0x40] sm:$0xff]
        %v325 = vld [vmem:[%s273 + $0x48] sm:$0xff]
        %v326 = vld [vmem:[%s273 + $0x50] sm:$0xff]
        %v327 = vld [vmem:[%s273 + $0x58] sm:$0xff]
        %v328 = vld [vmem:[%s273 + $0x60] sm:$0xff]
        %v329 = vld [vmem:[%s273 + $0x68] sm:$0xff]
        %v330 = vld [vmem:[%s273 + $0x70] sm:$0xff]
        %v331 = vld [vmem:[%s273 + $0x78] sm:$0xff]
        %v332 = vld [vmem:[#allocation5] sm:$0xff]
        %v333 = vld [vmem:[#allocation5 + $0x8] sm:$0xff]
        %v334 = vld [vmem:[#allocation5 + $0x10] sm:$0xff]
        %v335 = vld [vmem:[#allocation5 + $0x18] sm:$0xff]
        %v336 = vld [vmem:[#allocation5 + $0x20] sm:$0xff]
        %v337 = vld [vmem:[#allocation5 + $0x28] sm:$0xff]
        %v338 = vld [vmem:[#allocation5 + $0x30] sm:$0xff]
        %v339 = vld [vmem:[#allocation5 + $0x38] sm:$0xff]
        %v340 = vld [vmem:[#allocation5 + $0x40] sm:$0xff]
        %v341 = vld [vmem:[#allocation5 + $0x48] sm:$0xff]
        %v342 = vld [vmem:[#allocation5 + $0x50] sm:$0xff]
        %v343 = vld [vmem:[#allocation5 + $0x58] sm:$0xff]
        %v344 = vld [vmem:[#allocation5 + $0x60] sm:$0xff]
        %v345 = vld [vmem:[#allocation5 + $0x68] sm:$0xff]
        %v346 = vld [vmem:[#allocation5 + $0x70] sm:$0xff]
        %v347 = vld [vmem:[#allocation5 + $0x78] sm:$0xff]
        %v348 = vld [vmem:[%s2] sm:$0x1]
        %v350 = vlaneseq
        %v351 = vshrl.u32 %v350, 7
        %v352 = vsub.s32 0, %v351
        %v353 = vrot.slane %v348, %v352
        %355 = vmatprep.subr.mxu0 0.0
        %356 = vmatpush1.msra.mxu0 %v347
        %357 = vmatprep.subr.mxu0 0.0
        %358 = vmatpush1.msra.mxu0 %v346
        %359 = vmatprep.subr.mxu0 0.0
        %360 = vmatpush1.msra.mxu0 %v345
        %361 = vmatprep.subr.mxu0 0.0
        %362 = vmatpush1.msra.mxu0 %v344
        %363 = vmatprep.subr.mxu0 0.0
        %364 = vmatpush1.msra.mxu0 %v343
        %365 = vmatprep.subr.mxu0 0.0
        %366 = vmatpush1.msra.mxu0 %v342
        %367 = vmatprep.subr.mxu0 0.0
        %368 = vmatpush1.msra.mxu0 %v341
        %369 = vmatprep.subr.mxu0 0.0
        %370 = vmatpush1.msra.mxu0 %v340
        %371 = vmatprep.subr.mxu0 0.0
        %372 = vmatpush1.msra.mxu0 %v339
        %373 = vmatprep.subr.mxu0 0.0
        %374 = vmatpush1.msra.mxu0 %v338
        %375 = vmatprep.subr.mxu0 0.0
        %376 = vmatpush1.msra.mxu0 %v337
        %377 = vmatprep.subr.mxu0 0.0
        %378 = vmatpush1.msra.mxu0 %v336
        %379 = vmatprep.subr.mxu0 0.0
        %380 = vmatpush1.msra.mxu0 %v335
        %381 = vmatprep.subr.mxu0 0.0
        %382 = vmatpush1.msra.mxu0 %v334
        %383 = vmatprep.subr.mxu0 0.0
        %384 = vmatpush1.msra.mxu0 %v333
        %385 = vmatprep.subr.mxu0 0.0
        %386 = vmatpush1.msra.mxu0 %v332
        %387 = vmatprep.subr.mxu0 0.0
        %388 = vmatpush2.msra.mxu0 0.0
        %389 = vmatprep.subr.mxu0 0.0
        %390 = vmatpush2.msra.mxu0 0.0
        %391 = vmatprep.subr.mxu0 0.0
        %392 = vmatpush2.msra.mxu0 0.0
        %393 = vmatprep.subr.mxu0 0.0
        %394 = vmatpush2.msra.mxu0 0.0
        %395 = vmatprep.subr.mxu0 0.0
        %396 = vmatpush2.msra.mxu0 0.0
        %397 = vmatprep.subr.mxu0 0.0
        %398 = vmatpush2.msra.mxu0 0.0
        %399 = vmatprep.subr.mxu0 0.0
        %400 = vmatpush2.msra.mxu0 0.0
        %401 = vmatprep.subr.mxu0 0.0
        %402 = vmatpush2.msra.mxu0 0.0
        %403 = vmatprep.subr.mxu0 0.0
        %404 = vmatpush2.msra.mxu0 0.0
        %405 = vmatprep.subr.mxu0 0.0
        %406 = vmatpush2.msra.mxu0 0.0
        %407 = vmatprep.subr.mxu0 0.0
        %408 = vmatpush2.msra.mxu0 0.0
        %409 = vmatprep.subr.mxu0 0.0
        %410 = vmatpush2.msra.mxu0 0.0
        %411 = vmatprep.subr.mxu0 0.0
        %412 = vmatpush2.msra.mxu0 0.0
        %413 = vmatprep.subr.mxu0 0.0
        %414 = vmatpush2.msra.mxu0 0.0
        %415 = vmatprep.subr.mxu0 0.0
        %416 = vmatpush2.msra.mxu0 0.0
        %417 = vmatprep.subr.mxu0 0.0
        %418 = vmatpush2.msra.mxu0 0.0
        %419 = vmatprep.mubr.f32.mxu0 0.0
        %420 = vmatmul.mubr.f32.gmra.mxu0 %v316
        %v421 = vpop.f32.mrf.mxu0
        %v422 = vadd.f32 %v353, %v421
        %v423 = vpop.f32.mrf.mxu0
        %424 = vmatprep.mubr.f32.mxu0 0.0
        %425 = vmatmul.mubr.f32.gmra.mxu0 %v317
        %v426 = vpop.f32.mrf.mxu0
        %v427 = vadd.f32 %v353, %v426
        %v428 = vpop.f32.mrf.mxu0
        %429 = vmatprep.mubr.f32.mxu0 0.0
        %430 = vmatmul.mubr.f32.gmra.mxu0 %v318
        %v431 = vpop.f32.mrf.mxu0
        %v432 = vadd.f32 %v353, %v431
        %v433 = vpop.f32.mrf.mxu0
        %434 = vmatprep.mubr.f32.mxu0 0.0
        %435 = vmatmul.mubr.f32.gmra.mxu0 %v319
        %v436 = vpop.f32.mrf.mxu0
        %v437 = vadd.f32 %v353, %v436
        %v438 = vpop.f32.mrf.mxu0
        %439 = vmatprep.mubr.f32.mxu0 0.0
        %440 = vmatmul.mubr.f32.gmra.mxu0 %v320
        %v441 = vpop.f32.mrf.mxu0
        %v442 = vadd.f32 %v353, %v441
        %v443 = vpop.f32.mrf.mxu0
        %444 = vmatprep.mubr.f32.mxu0 0.0
        %445 = vmatmul.mubr.f32.gmra.mxu0 %v321
        %v446 = vpop.f32.mrf.mxu0
        %v447 = vadd.f32 %v353, %v446
        %v448 = vpop.f32.mrf.mxu0
        %449 = vmatprep.mubr.f32.mxu0 0.0
        %450 = vmatmul.mubr.f32.gmra.mxu0 %v322
        %v451 = vpop.f32.mrf.mxu0
        %v452 = vadd.f32 %v353, %v451
        %v453 = vpop.f32.mrf.mxu0
        %454 = vmatprep.mubr.f32.mxu0 0.0
        %455 = vmatmul.mubr.f32.gmra.mxu0 %v323
        %v456 = vpop.f32.mrf.mxu0
        %v457 = vadd.f32 %v353, %v456
        %v458 = vpop.f32.mrf.mxu0
        %459 = vmatprep.mubr.f32.mxu0 0.0
        %460 = vmatmul.mubr.f32.gmra.mxu0 %v324
        %v461 = vpop.f32.mrf.mxu0
        %v462 = vadd.f32 %v353, %v461
        %v463 = vpop.f32.mrf.mxu0
        %464 = vmatprep.mubr.f32.mxu0 0.0
        %465 = vmatmul.mubr.f32.gmra.mxu0 %v325
        %v466 = vpop.f32.mrf.mxu0
        %v467 = vadd.f32 %v353, %v466
        %v468 = vpop.f32.mrf.mxu0
        %469 = vmatprep.mubr.f32.mxu0 0.0
        %470 = vmatmul.mubr.f32.gmra.mxu0 %v326
        %v471 = vpop.f32.mrf.mxu0
        %v472 = vadd.f32 %v353, %v471
        %v473 = vpop.f32.mrf.mxu0
        %474 = vmatprep.mubr.f32.mxu0 0.0
        %475 = vmatmul.mubr.f32.gmra.mxu0 %v327
        %v476 = vpop.f32.mrf.mxu0
        %v477 = vadd.f32 %v353, %v476
        %v478 = vpop.f32.mrf.mxu0
        %479 = vmatprep.mubr.f32.mxu0 0.0
        %480 = vmatmul.mubr.f32.gmra.mxu0 %v328
        %v481 = vpop.f32.mrf.mxu0
        %v482 = vadd.f32 %v353, %v481
        %v483 = vpop.f32.mrf.mxu0
        %484 = vmatprep.mubr.f32.mxu0 0.0
        %485 = vmatmul.mubr.f32.gmra.mxu0 %v329
        %v486 = vpop.f32.mrf.mxu0
        %v487 = vadd.f32 %v353, %v486
        %v488 = vpop.f32.mrf.mxu0
        %489 = vmatprep.mubr.f32.mxu0 0.0
        %490 = vmatmul.mubr.f32.gmra.mxu0 %v330
        %v491 = vpop.f32.mrf.mxu0
        %v492 = vadd.f32 %v353, %v491
        %v493 = vpop.f32.mrf.mxu0
        %494 = vmatprep.mubr.f32.mxu0 0.0
        %495 = vmatmul.mubr.f32.gmra.mxu0 %v331
        %v496 = vpop.f32.mrf.mxu0
        %v497 = vadd.f32 %v353, %v496
        %v498 = vpop.f32.mrf.mxu0
        %499 = vdwg.mxu0
        %v500 = vld [vmem:[#allocation7] sm:$0xff]
        %v501 = vld [vmem:[#allocation7 + $0x8] sm:$0xff]
        %v502 = vld [vmem:[#allocation7 + $0x10] sm:$0xff]
        %v503 = vld [vmem:[#allocation7 + $0x18] sm:$0xff]
        %v504 = vld [vmem:[#allocation7 + $0x20] sm:$0xff]
        %v505 = vld [vmem:[#allocation7 + $0x28] sm:$0xff]
        %v506 = vld [vmem:[#allocation7 + $0x30] sm:$0xff]
        %v507 = vld [vmem:[#allocation7 + $0x38] sm:$0xff]
        %v508 = vld [vmem:[#allocation7 + $0x40] sm:$0xff]
        %v509 = vld [vmem:[#allocation7 + $0x48] sm:$0xff]
        %v510 = vld [vmem:[#allocation7 + $0x50] sm:$0xff]
        %v511 = vld [vmem:[#allocation7 + $0x58] sm:$0xff]
        %v512 = vld [vmem:[#allocation7 + $0x60] sm:$0xff]
        %v513 = vld [vmem:[#allocation7 + $0x68] sm:$0xff]
        %v514 = vld [vmem:[#allocation7 + $0x70] sm:$0xff]
        %v515 = vld [vmem:[#allocation7 + $0x78] sm:$0xff]
        %v516 = vld [vmem:[%s5] sm:$0x1]
        %v518 = vlaneseq
        %v519 = vshrl.u32 %v518, 7
        %v520 = vsub.s32 0, %v519
        %v521 = vrot.slane %v516, %v520
        %523 = vmatprep.subr.mxu0 0.0
        %524 = vmatpush1.xpose.msra.mxu0 %v515
        %525 = vmatprep.subr.mxu0 0.0
        %526 = vmatpush1.xpose.msra.mxu0 %v514
        %527 = vmatprep.subr.mxu0 0.0
        %528 = vmatpush1.xpose.msra.mxu0 %v513
        %529 = vmatprep.subr.mxu0 0.0
        %530 = vmatpush1.xpose.msra.mxu0 %v512
        %531 = vmatprep.subr.mxu0 0.0
        %532 = vmatpush1.xpose.msra.mxu0 %v511
        %533 = vmatprep.subr.mxu0 0.0
        %534 = vmatpush1.xpose.msra.mxu0 %v510
        %535 = vmatprep.subr.mxu0 0.0
        %536 = vmatpush1.xpose.msra.mxu0 %v509
        %537 = vmatprep.subr.mxu0 0.0
        %538 = vmatpush1.xpose.msra.mxu0 %v508
        %539 = vmatprep.subr.mxu0 0.0
        %540 = vmatpush1.xpose.msra.mxu0 %v507
        %541 = vmatprep.subr.mxu0 0.0
        %542 = vmatpush1.xpose.msra.mxu0 %v506
        %543 = vmatprep.subr.mxu0 0.0
        %544 = vmatpush1.xpose.msra.mxu0 %v505
        %545 = vmatprep.subr.mxu0 0.0
        %546 = vmatpush1.xpose.msra.mxu0 %v504
        %547 = vmatprep.subr.mxu0 0.0
        %548 = vmatpush1.xpose.msra.mxu0 %v503
        %549 = vmatprep.subr.mxu0 0.0
        %550 = vmatpush1.xpose.msra.mxu0 %v502
        %551 = vmatprep.subr.mxu0 0.0
        %552 = vmatpush1.xpose.msra.mxu0 %v501
        %553 = vmatprep.subr.mxu0 0.0
        %554 = vmatpush1.xpose.msra.mxu0 %v500
        %555 = vmatprep.subr.mxu0 0.0
        %556 = vmatpush2.xpose.msra.mxu0 0.0
        %557 = vmatprep.subr.mxu0 0.0
        %558 = vmatpush2.xpose.msra.mxu0 0.0
        %559 = vmatprep.subr.mxu0 0.0
        %560 = vmatpush2.xpose.msra.mxu0 0.0
        %561 = vmatprep.subr.mxu0 0.0
        %562 = vmatpush2.xpose.msra.mxu0 0.0
        %563 = vmatprep.subr.mxu0 0.0
        %564 = vmatpush2.xpose.msra.mxu0 0.0
        %565 = vmatprep.subr.mxu0 0.0
        %566 = vmatpush2.xpose.msra.mxu0 0.0
        %567 = vmatprep.subr.mxu0 0.0
        %568 = vmatpush2.xpose.msra.mxu0 0.0
        %569 = vmatprep.subr.mxu0 0.0
        %570 = vmatpush2.xpose.msra.mxu0 0.0
        %571 = vmatprep.subr.mxu0 0.0
        %572 = vmatpush2.xpose.msra.mxu0 0.0
        %573 = vmatprep.subr.mxu0 0.0
        %574 = vmatpush2.xpose.msra.mxu0 0.0
        %575 = vmatprep.subr.mxu0 0.0
        %576 = vmatpush2.xpose.msra.mxu0 0.0
        %577 = vmatprep.subr.mxu0 0.0
        %578 = vmatpush2.xpose.msra.mxu0 0.0
        %579 = vmatprep.subr.mxu0 0.0
        %580 = vmatpush2.xpose.msra.mxu0 0.0
        %581 = vmatprep.subr.mxu0 0.0
        %582 = vmatpush2.xpose.msra.mxu0 0.0
        %583 = vmatprep.subr.mxu0 0.0
        %584 = vmatpush2.xpose.msra.mxu0 0.0
        %585 = vmatprep.subr.mxu0 0.0
        %586 = vmatpush2.xpose.msra.mxu0 0.0
        %587 = vmatprep.mubr.f32.mxu0 0.0
        %588 = vmatmul.mubr.f32.gmra.mxu0 %v422
        %v589 = vpop.f32.mrf.mxu0
        %v590 = vadd.f32 %v521, %v589
        %v591 = vpop.f32.mrf.mxu0
        %592 = vmatprep.mubr.f32.mxu0 0.0
        %593 = vmatmul.mubr.f32.gmra.mxu0 %v427
        %v594 = vpop.f32.mrf.mxu0
        %v595 = vadd.f32 %v521, %v594
        %v596 = vpop.f32.mrf.mxu0
        %597 = vmatprep.mubr.f32.mxu0 0.0
        %598 = vmatmul.mubr.f32.gmra.mxu0 %v432
        %v599 = vpop.f32.mrf.mxu0
        %v600 = vadd.f32 %v521, %v599
        %v601 = vpop.f32.mrf.mxu0
        %602 = vmatprep.mubr.f32.mxu0 0.0
        %603 = vmatmul.mubr.f32.gmra.mxu0 %v437
        %v604 = vpop.f32.mrf.mxu0
        %v605 = vadd.f32 %v521, %v604
        %v606 = vpop.f32.mrf.mxu0
        %607 = vmatprep.mubr.f32.mxu0 0.0
        %608 = vmatmul.mubr.f32.gmra.mxu0 %v442
        %v609 = vpop.f32.mrf.mxu0
        %v610 = vadd.f32 %v521, %v609
        %v611 = vpop.f32.mrf.mxu0
        %612 = vmatprep.mubr.f32.mxu0 0.0
        %613 = vmatmul.mubr.f32.gmra.mxu0 %v447
        %v614 = vpop.f32.mrf.mxu0
        %v615 = vadd.f32 %v521, %v614
        %v616 = vpop.f32.mrf.mxu0
        %617 = vmatprep.mubr.f32.mxu0 0.0
        %618 = vmatmul.mubr.f32.gmra.mxu0 %v452
        %v619 = vpop.f32.mrf.mxu0
        %v620 = vadd.f32 %v521, %v619
        %v621 = vpop.f32.mrf.mxu0
        %622 = vmatprep.mubr.f32.mxu0 0.0
        %623 = vmatmul.mubr.f32.gmra.mxu0 %v457
        %v624 = vpop.f32.mrf.mxu0
        %v625 = vadd.f32 %v521, %v624
        %v626 = vpop.f32.mrf.mxu0
        %627 = vmatprep.mubr.f32.mxu0 0.0
        %628 = vmatmul.mubr.f32.gmra.mxu0 %v462
        %v629 = vpop.f32.mrf.mxu0
        %v630 = vadd.f32 %v521, %v629
        %v631 = vpop.f32.mrf.mxu0
        %632 = vmatprep.mubr.f32.mxu0 0.0
        %633 = vmatmul.mubr.f32.gmra.mxu0 %v467
        %v634 = vpop.f32.mrf.mxu0
        %v635 = vadd.f32 %v521, %v634
        %v636 = vpop.f32.mrf.mxu0
        %637 = vmatprep.mubr.f32.mxu0 0.0
        %638 = vmatmul.mubr.f32.gmra.mxu0 %v472
        %v639 = vpop.f32.mrf.mxu0
        %v640 = vadd.f32 %v521, %v639
        %v641 = vpop.f32.mrf.mxu0
        %642 = vmatprep.mubr.f32.mxu0 0.0
        %643 = vmatmul.mubr.f32.gmra.mxu0 %v477
        %v644 = vpop.f32.mrf.mxu0
        %v645 = vadd.f32 %v521, %v644
        %v646 = vpop.f32.mrf.mxu0
        %647 = vmatprep.mubr.f32.mxu0 0.0
        %648 = vmatmul.mubr.f32.gmra.mxu0 %v482
        %v649 = vpop.f32.mrf.mxu0
        %v650 = vadd.f32 %v521, %v649
        %v651 = vpop.f32.mrf.mxu0
        %652 = vmatprep.mubr.f32.mxu0 0.0
        %653 = vmatmul.mubr.f32.gmra.mxu0 %v487
        %v654 = vpop.f32.mrf.mxu0
        %v655 = vadd.f32 %v521, %v654
        %v656 = vpop.f32.mrf.mxu0
        %657 = vmatprep.mubr.f32.mxu0 0.0
        %658 = vmatmul.mubr.f32.gmra.mxu0 %v492
        %v659 = vpop.f32.mrf.mxu0
        %v660 = vadd.f32 %v521, %v659
        %v661 = vpop.f32.mrf.mxu0
        %662 = vmatprep.mubr.f32.mxu0 0.0
        %663 = vmatmul.mubr.f32.gmra.mxu0 %v497
        %v664 = vpop.f32.mrf.mxu0
        %v665 = vadd.f32 %v521, %v664
        %v666 = vpop.f32.mrf.mxu0
        %667 = vdwg.mxu0
        %668 = vmax.xlane.f32.xlu0 %v590
        %v669 = vpop.xlane.xlu0 %668
        %670 = vmax.xlane.f32.xlu0 %v595
        %v671 = vpop.xlane.xlu0 %670
        %672 = vmax.xlane.f32.xlu0 %v600
        %v673 = vpop.xlane.xlu0 %672
        %674 = vmax.xlane.f32.xlu0 %v605
        %v675 = vpop.xlane.xlu0 %674
        %676 = vmax.xlane.f32.xlu0 %v610
        %v677 = vpop.xlane.xlu0 %676
        %678 = vmax.xlane.f32.xlu0 %v615
        %v679 = vpop.xlane.xlu0 %678
        %680 = vmax.xlane.f32.xlu0 %v620
        %v681 = vpop.xlane.xlu0 %680
        %682 = vmax.xlane.f32.xlu0 %v625
        %v683 = vpop.xlane.xlu0 %682
        %684 = vmax.xlane.f32.xlu0 %v630
        %v685 = vpop.xlane.xlu0 %684
        %686 = vmax.xlane.f32.xlu0 %v635
        %v687 = vpop.xlane.xlu0 %686
        %688 = vmax.xlane.f32.xlu0 %v640
        %v689 = vpop.xlane.xlu0 %688
        %690 = vmax.xlane.f32.xlu0 %v645
        %v691 = vpop.xlane.xlu0 %690
        %692 = vmax.xlane.f32.xlu0 %v650
        %v693 = vpop.xlane.xlu0 %692
        %694 = vmax.xlane.f32.xlu0 %v655
        %v695 = vpop.xlane.xlu0 %694
        %696 = vmax.xlane.f32.xlu0 %v660
        %v697 = vpop.xlane.xlu0 %696
        %698 = vmax.xlane.f32.xlu0 %v665
        %v699 = vpop.xlane.xlu0 %698
        %v700 = vsub.f32 %v590, %v669
        %v701 = vsub.f32 %v595, %v671
        %v702 = vsub.f32 %v600, %v673
        %v703 = vsub.f32 %v605, %v675
        %v704 = vsub.f32 %v610, %v677
        %v705 = vsub.f32 %v615, %v679
        %v706 = vsub.f32 %v620, %v681
        %v707 = vsub.f32 %v625, %v683
        %v708 = vsub.f32 %v630, %v685
        %v709 = vsub.f32 %v635, %v687
        %v710 = vsub.f32 %v640, %v689
        %v711 = vsub.f32 %v645, %v691
        %v712 = vsub.f32 %v650, %v693
        %v713 = vsub.f32 %v655, %v695
        %v714 = vsub.f32 %v660, %v697
        %v715 = vsub.f32 %v665, %v699
        %v716 = vmul.f32 %v700, 1.442695
        %v717 = vpow.pop %v716
        %v718 = vmul.f32 %v701, 1.442695
        %v719 = vpow.pop %v718
        %v720 = vmul.f32 %v702, 1.442695
        %v721 = vpow.pop %v720
        %v722 = vmul.f32 %v703, 1.442695
        %v723 = vpow.pop %v722
        %v724 = vmul.f32 %v704, 1.442695
        %v725 = vpow.pop %v724
        %v726 = vmul.f32 %v705, 1.442695
        %v727 = vpow.pop %v726
        %v728 = vmul.f32 %v706, 1.442695
        %v729 = vpow.pop %v728
        %v730 = vmul.f32 %v707, 1.442695
        %v731 = vpow.pop %v730
        %v732 = vmul.f32 %v708, 1.442695
        %v733 = vpow.pop %v732
        %v734 = vmul.f32 %v709, 1.442695
        %v735 = vpow.pop %v734
        %v736 = vmul.f32 %v710, 1.442695
        %v737 = vpow.pop %v736
        %v738 = vmul.f32 %v711, 1.442695
        %v739 = vpow.pop %v738
        %v740 = vmul.f32 %v712, 1.442695
        %v741 = vpow.pop %v740
        %v742 = vmul.f32 %v713, 1.442695
        %v743 = vpow.pop %v742
        %v744 = vmul.f32 %v714, 1.442695
        %v745 = vpow.pop %v744
        %v746 = vmul.f32 %v715, 1.442695
        %v747 = vpow.pop %v746
        %748 = vadd.xlane.f32.xlu0 %v717
        %v749 = vpop.xlane.xlu0 %748
        %750 = vadd.xlane.f32.xlu0 %v719
        %v751 = vpop.xlane.xlu0 %750
        %752 = vadd.xlane.f32.xlu0 %v721
        %v753 = vpop.xlane.xlu0 %752
        %754 = vadd.xlane.f32.xlu0 %v723
        %v755 = vpop.xlane.xlu0 %754
        %756 = vadd.xlane.f32.xlu0 %v725
        %v757 = vpop.xlane.xlu0 %756
        %758 = vadd.xlane.f32.xlu0 %v727
        %v759 = vpop.xlane.xlu0 %758
        %760 = vadd.xlane.f32.xlu0 %v729
        %v761 = vpop.xlane.xlu0 %760
        %762 = vadd.xlane.f32.xlu0 %v731
        %v763 = vpop.xlane.xlu0 %762
        %764 = vadd.xlane.f32.xlu0 %v733
        %v765 = vpop.xlane.xlu0 %764
        %766 = vadd.xlane.f32.xlu0 %v735
        %v767 = vpop.xlane.xlu0 %766
        %768 = vadd.xlane.f32.xlu0 %v737
        %v769 = vpop.xlane.xlu0 %768
        %770 = vadd.xlane.f32.xlu0 %v739
        %v771 = vpop.xlane.xlu0 %770
        %772 = vadd.xlane.f32.xlu0 %v741
        %v773 = vpop.xlane.xlu0 %772
        %774 = vadd.xlane.f32.xlu0 %v743
        %v775 = vpop.xlane.xlu0 %774
        %776 = vadd.xlane.f32.xlu0 %v745
        %v777 = vpop.xlane.xlu0 %776
        %778 = vadd.xlane.f32.xlu0 %v747
        %v779 = vpop.xlane.xlu0 %778
        %v780 = vld [vmem:[#allocation8] sm:$0xff]
        %v781 = vld [vmem:[#allocation8 + $0x8] sm:$0xff]
        %v782 = vld [vmem:[#allocation8 + $0x10] sm:$0xff]
        %v783 = vld [vmem:[#allocation8 + $0x18] sm:$0xff]
        %v784 = vld [vmem:[#allocation8 + $0x20] sm:$0xff]
        %v785 = vld [vmem:[#allocation8 + $0x28] sm:$0xff]
        %v786 = vld [vmem:[#allocation8 + $0x30] sm:$0xff]
        %v787 = vld [vmem:[#allocation8 + $0x38] sm:$0xff]
        %v788 = vld [vmem:[#allocation8 + $0x40] sm:$0xff]
        %v789 = vld [vmem:[#allocation8 + $0x48] sm:$0xff]
        %v790 = vld [vmem:[#allocation8 + $0x50] sm:$0xff]
        %v791 = vld [vmem:[#allocation8 + $0x58] sm:$0xff]
        %v792 = vld [vmem:[#allocation8 + $0x60] sm:$0xff]
        %v793 = vld [vmem:[#allocation8 + $0x68] sm:$0xff]
        %v794 = vld [vmem:[#allocation8 + $0x70] sm:$0xff]
        %v795 = vld [vmem:[#allocation8 + $0x78] sm:$0xff]
        %796 = vmatprep.subr.mxu0 0.0
        %797 = vmatpush1.msra.mxu0 %v795
        %798 = vmatprep.subr.mxu0 0.0
        %799 = vmatpush1.msra.mxu0 %v794
        %800 = vmatprep.subr.mxu0 0.0
        %801 = vmatpush1.msra.mxu0 %v793
        %802 = vmatprep.subr.mxu0 0.0
        %803 = vmatpush1.msra.mxu0 %v792
        %804 = vmatprep.subr.mxu0 0.0
        %805 = vmatpush1.msra.mxu0 %v791
        %806 = vmatprep.subr.mxu0 0.0
        %807 = vmatpush1.msra.mxu0 %v790
        %808 = vmatprep.subr.mxu0 0.0
        %809 = vmatpush1.msra.mxu0 %v789
        %810 = vmatprep.subr.mxu0 0.0
        %811 = vmatpush1.msra.mxu0 %v788
        %812 = vmatprep.subr.mxu0 0.0
        %813 = vmatpush1.msra.mxu0 %v787
        %814 = vmatprep.subr.mxu0 0.0
        %815 = vmatpush1.msra.mxu0 %v786
        %816 = vmatprep.subr.mxu0 0.0
        %817 = vmatpush1.msra.mxu0 %v785
        %818 = vmatprep.subr.mxu0 0.0
        %819 = vmatpush1.msra.mxu0 %v784
        %820 = vmatprep.subr.mxu0 0.0
        %821 = vmatpush1.msra.mxu0 %v783
        %822 = vmatprep.subr.mxu0 0.0
        %823 = vmatpush1.msra.mxu0 %v782
        %824 = vmatprep.subr.mxu0 0.0
        %825 = vmatpush1.msra.mxu0 %v781
        %826 = vmatprep.subr.mxu0 0.0
        %827 = vmatpush1.msra.mxu0 %v780
        %828 = vmatprep.subr.mxu0 0.0
        %829 = vmatpush2.msra.mxu0 0.0
        %830 = vmatprep.subr.mxu0 0.0
        %831 = vmatpush2.msra.mxu0 0.0
        %832 = vmatprep.subr.mxu0 0.0
        %833 = vmatpush2.msra.mxu0 0.0
        %834 = vmatprep.subr.mxu0 0.0
        %835 = vmatpush2.msra.mxu0 0.0
        %836 = vmatprep.subr.mxu0 0.0
        %837 = vmatpush2.msra.mxu0 0.0
        %838 = vmatprep.subr.mxu0 0.0
        %839 = vmatpush2.msra.mxu0 0.0
        %840 = vmatprep.subr.mxu0 0.0
        %841 = vmatpush2.msra.mxu0 0.0
        %842 = vmatprep.subr.mxu0 0.0
        %843 = vmatpush2.msra.mxu0 0.0
        %844 = vmatprep.subr.mxu0 0.0
        %845 = vmatpush2.msra.mxu0 0.0
        %846 = vmatprep.subr.mxu0 0.0
        %847 = vmatpush2.msra.mxu0 0.0
        %848 = vmatprep.subr.mxu0 0.0
        %849 = vmatpush2.msra.mxu0 0.0
        %850 = vmatprep.subr.mxu0 0.0
        %851 = vmatpush2.msra.mxu0 0.0
        %852 = vmatprep.subr.mxu0 0.0
        %853 = vmatpush2.msra.mxu0 0.0
        %854 = vmatprep.subr.mxu0 0.0
        %855 = vmatpush2.msra.mxu0 0.0
        %856 = vmatprep.subr.mxu0 0.0
        %857 = vmatpush2.msra.mxu0 0.0
        %858 = vmatprep.subr.mxu0 0.0
        %859 = vmatpush2.msra.mxu0 0.0
        %860 = vmatprep.mubr.f32.mxu0 0.0
        %861 = vmatmul.mubr.f32.gmra.mxu0 %v717
        %v862 = vpop.f32.mrf.mxu0
        %v863 = vadd.f32 0.0, %v862
        %v864 = vpop.f32.mrf.mxu0
        %865 = vmatprep.mubr.f32.mxu0 0.0
        %866 = vmatmul.mubr.f32.gmra.mxu0 %v719
        %v867 = vpop.f32.mrf.mxu0
        %v868 = vadd.f32 0.0, %v867
        %v869 = vpop.f32.mrf.mxu0
        %870 = vmatprep.mubr.f32.mxu0 0.0
        %871 = vmatmul.mubr.f32.gmra.mxu0 %v721
        %v872 = vpop.f32.mrf.mxu0
        %v873 = vadd.f32 0.0, %v872
        %v874 = vpop.f32.mrf.mxu0
        %875 = vmatprep.mubr.f32.mxu0 0.0
        %876 = vmatmul.mubr.f32.gmra.mxu0 %v723
        %v877 = vpop.f32.mrf.mxu0
        %v878 = vadd.f32 0.0, %v877
        %v879 = vpop.f32.mrf.mxu0
        %880 = vmatprep.mubr.f32.mxu0 0.0
        %881 = vmatmul.mubr.f32.gmra.mxu0 %v725
        %v882 = vpop.f32.mrf.mxu0
        %v883 = vadd.f32 0.0, %v882
        %v884 = vpop.f32.mrf.mxu0
        %885 = vmatprep.mubr.f32.mxu0 0.0
        %886 = vmatmul.mubr.f32.gmra.mxu0 %v727
        %v887 = vpop.f32.mrf.mxu0
        %v888 = vadd.f32 0.0, %v887
        %v889 = vpop.f32.mrf.mxu0
        %890 = vmatprep.mubr.f32.mxu0 0.0
        %891 = vmatmul.mubr.f32.gmra.mxu0 %v729
        %v892 = vpop.f32.mrf.mxu0
        %v893 = vadd.f32 0.0, %v892
        %v894 = vpop.f32.mrf.mxu0
        %895 = vmatprep.mubr.f32.mxu0 0.0
        %896 = vmatmul.mubr.f32.gmra.mxu0 %v731
        %v897 = vpop.f32.mrf.mxu0
        %v898 = vadd.f32 0.0, %v897
        %v899 = vpop.f32.mrf.mxu0
        %900 = vmatprep.mubr.f32.mxu0 0.0
        %901 = vmatmul.mubr.f32.gmra.mxu0 %v733
        %v902 = vpop.f32.mrf.mxu0
        %v903 = vadd.f32 0.0, %v902
        %v904 = vpop.f32.mrf.mxu0
        %905 = vmatprep.mubr.f32.mxu0 0.0
        %906 = vmatmul.mubr.f32.gmra.mxu0 %v735
        %v907 = vpop.f32.mrf.mxu0
        %v908 = vadd.f32 0.0, %v907
        %v909 = vpop.f32.mrf.mxu0
        %910 = vmatprep.mubr.f32.mxu0 0.0
        %911 = vmatmul.mubr.f32.gmra.mxu0 %v737
        %v912 = vpop.f32.mrf.mxu0
        %v913 = vadd.f32 0.0, %v912
        %v914 = vpop.f32.mrf.mxu0
        %915 = vmatprep.mubr.f32.mxu0 0.0
        %916 = vmatmul.mubr.f32.gmra.mxu0 %v739
        %v917 = vpop.f32.mrf.mxu0
        %v918 = vadd.f32 0.0, %v917
        %v919 = vpop.f32.mrf.mxu0
        %920 = vmatprep.mubr.f32.mxu0 0.0
        %921 = vmatmul.mubr.f32.gmra.mxu0 %v741
        %v922 = vpop.f32.mrf.mxu0
        %v923 = vadd.f32 0.0, %v922
        %v924 = vpop.f32.mrf.mxu0
        %925 = vmatprep.mubr.f32.mxu0 0.0
        %926 = vmatmul.mubr.f32.gmra.mxu0 %v743
        %v927 = vpop.f32.mrf.mxu0
        %v928 = vadd.f32 0.0, %v927
        %v929 = vpop.f32.mrf.mxu0
        %930 = vmatprep.mubr.f32.mxu0 0.0
        %931 = vmatmul.mubr.f32.gmra.mxu0 %v745
        %v932 = vpop.f32.mrf.mxu0
        %v933 = vadd.f32 0.0, %v932
        %v934 = vpop.f32.mrf.mxu0
        %935 = vmatprep.mubr.f32.mxu0 0.0
        %936 = vmatmul.mubr.f32.gmra.mxu0 %v747
        %v937 = vpop.f32.mrf.mxu0
        %v938 = vadd.f32 0.0, %v937
        %v939 = vpop.f32.mrf.mxu0
        %940 = vdwg.mxu0
        %v941 = vrcp.pop %v749
        %v942 = vrcp.pop %v751
        %v943 = vrcp.pop %v753
        %v944 = vrcp.pop %v755
        %v945 = vrcp.pop %v757
        %v946 = vrcp.pop %v759
        %v947 = vrcp.pop %v761
        %v948 = vrcp.pop %v763
        %v949 = vrcp.pop %v765
        %v950 = vrcp.pop %v767
        %v951 = vrcp.pop %v769
        %v952 = vrcp.pop %v771
        %v953 = vrcp.pop %v773
        %v954 = vrcp.pop %v775
        %v955 = vrcp.pop %v777
        %v956 = vrcp.pop %v779
        %v957 = vmul.f32 %v941, 0.17677669
        %v958 = vmul.f32 %v942, 0.17677669
        %v959 = vmul.f32 %v943, 0.17677669
        %v960 = vmul.f32 %v944, 0.17677669
        %v961 = vmul.f32 %v945, 0.17677669
        %v962 = vmul.f32 %v946, 0.17677669
        %v963 = vmul.f32 %v947, 0.17677669
        %v964 = vmul.f32 %v948, 0.17677669
        %v965 = vmul.f32 %v949, 0.17677669
        %v966 = vmul.f32 %v950, 0.17677669
        %v967 = vmul.f32 %v951, 0.17677669
        %v968 = vmul.f32 %v952, 0.17677669
        %v969 = vmul.f32 %v953, 0.17677669
        %v970 = vmul.f32 %v954, 0.17677669
        %v971 = vmul.f32 %v955, 0.17677669
        %v972 = vmul.f32 %v956, 0.17677669
        %v973 = vmul.f32 %v863, %v957
        %v974 = vmul.f32 %v868, %v958
        %v975 = vmul.f32 %v873, %v959
        %v976 = vmul.f32 %v878, %v960
        %v977 = vmul.f32 %v883, %v961
        %v978 = vmul.f32 %v888, %v962
        %v979 = vmul.f32 %v893, %v963
        %v980 = vmul.f32 %v898, %v964
        %v981 = vmul.f32 %v903, %v965
        %v982 = vmul.f32 %v908, %v966
        %v983 = vmul.f32 %v913, %v967
        %v984 = vmul.f32 %v918, %v968
        %v985 = vmul.f32 %v923, %v969
        %v986 = vmul.f32 %v928, %v970
        %v987 = vmul.f32 %v933, %v971
        %v988 = vmul.f32 %v938, %v972
        %989 = vst [vmem:[%s313] sm:$0xff] %v973
        %990 = vst [vmem:[%s313 + $0x8] sm:$0xff] %v974
        %991 = vst [vmem:[%s313 + $0x10] sm:$0xff] %v975
        %992 = vst [vmem:[%s313 + $0x18] sm:$0xff] %v976
        %993 = vst [vmem:[%s313 + $0x20] sm:$0xff] %v977
        %994 = vst [vmem:[%s313 + $0x28] sm:$0xff] %v978
        %995 = vst [vmem:[%s313 + $0x30] sm:$0xff] %v979
        %996 = vst [vmem:[%s313 + $0x38] sm:$0xff] %v980
        %997 = vst [vmem:[%s313 + $0x40] sm:$0xff] %v981
        %998 = vst [vmem:[%s313 + $0x48] sm:$0xff] %v982
        %999 = vst [vmem:[%s313 + $0x50] sm:$0xff] %v983
        %1000 = vst [vmem:[%s313 + $0x58] sm:$0xff] %v984
        %1001 = vst [vmem:[%s313 + $0x60] sm:$0xff] %v985
        %1002 = vst [vmem:[%s313 + $0x68] sm:$0xff] %v986
        %1003 = vst [vmem:[%s313 + $0x70] sm:$0xff] %v987
        %1004 = vst [vmem:[%s313 + $0x78] sm:$0xff] %v988
        %s1005 = sand.u32 %s164, 1
        %s1006 = scalar_lea.sflag [#allocation4], %s1005
        %s1007 = sand.u32 %s164, 1
        %s1008 = smul.addr %s1007, 128
        %s1009 = scalar_lea.vmem [#allocation10], %s1008
        // Predicated region
        $region61: #{tpu_custom_call.1} parent=43 // pred_check
          %p1010 = pneg %p174
        $region62: #{tpu_custom_call.1} parent=43 // pred_check_branch
          %1012 = sbr.rel (%p1010) target = $region64
        $region63: #{tpu_custom_call.1} parent=43 // pred_region
          %s1013 = smul.u32 16, %s25
          %s1015 = ssub.s32 2048, 2048
          %1016 = vsyncadd %s1006, %s1015
          %s1017 = smul.addr %s1013, 128
          %s1018 = scalar_lea.hbm %s6, %s1017
          %s1019 = sshll.u32 %s1009, 4
          %s1020 = int_to_ptr.vmem [resolvable:$true] %s1019
          %1025 = dma.vmem_to_hbm [thread:$0]  %s1020, 2048, %s1018, %s1006, 128, 128, 8
        $region64: #{tpu_custom_call.1} parent=43 // pred_fallthru
          _
      $region44: #{tpu_custom_call.1} parent=5 // pred_fallthru
        _
      %p1026 = scmp.le.s32.totalorder 2, %s20
      // Predicated region
      $region65: #{tpu_custom_call.1} parent=5 // pred_check
        %p1027 = pneg %p1026
      $region66: #{tpu_custom_call.1} parent=5 // pred_check_branch
        %1029 = sbr.rel (%p1027) target = $region68
      $region67: #{tpu_custom_call.1} parent=5 // pred_region
        %s1030 = ssub.s32 %s20, 2
        // Predicated region
        $region69: #{tpu_custom_call.1} parent=67 // pred_check
          %p1031 = pneg %p180
        $region70: #{tpu_custom_call.1} parent=67 // pred_check_branch
          %1033 = sbr.rel (%p1031) target = $region72
        $region71: #{tpu_custom_call.1} parent=67 // pred_region
          %s1034 = sand.u32 %s165, 1
          %s1035 = scalar_lea.sflag [#allocation4], %s1034
          %s1036 = sand.u32 %s165, 1
          %s1037 = smul.addr %s1036, 128
          %s1038 = scalar_lea.vmem [#allocation10], %s1037
          %1039 = dma.done %s1035, 2048
        $region72: #{tpu_custom_call.1} parent=67 // pred_fallthru
          _
      $region68: #{tpu_custom_call.1} parent=5 // pred_fallthru
        _
    $region6: #{tpu_custom_call.1} parent=1 // loop_footer
      %s24 = sadd.s32 1, %s20
    $region7: #{tpu_custom_call.1} parent=1 // loop_footer_branch
      %19 = sbr.rel target = $region3
    $region8: #{tpu_custom_call.1} parent=1 // loop_exit
      _
    %1040 = vsyncpa [#allocation3], 1
    %s1041 = scalar_lea.sflag [#allocation3], 1
    %1042 = vsyncpa %s1041, 1
    %1043 = vsyncpa [#allocation6], 1
    %1044 = vsyncpa [#allocation9], 1
    %1045 = vsyncpa [#allocation4], 1
    %s1046 = scalar_lea.sflag [#allocation4], 1
    %1047 = vsyncpa %s1046, 1

</llo_original>
